<compile_context>
chip_gen: v6e
topology: v6e:2x2x1
jax: 0.10.0
libtpu: 0.0.40
codegen_flags: <defaults>
</compile_context>

<pallas_src>
import functools
import math

import jax
import jax.numpy as jnp
from jax.experimental import pallas as pl
from jax.experimental.pallas import tpu as pltpu

# Total double-buffered VMEM budget shared by all (inputs + output) blocks.
# 12 MiB keeps full double-buffering even inside v5e's 16 MiB scoped default.
_VMEM_BUDGET_BYTES = 12 * 1024 * 1024
# Below this many elements, pallas_call / per-step overhead dwarfs the math:
# let XLA fuse the elementwise expression instead.
_MIN_PALLAS_ELEMS = 32 * 1024
# Lane-dense layouts to try (all multiples of 128 -> unmasked lane stores).
_LANE_CANDIDATES = (1024, 512, 256, 128)


def _expression_kernel(expression_fn, *refs):
    """refs = (*input_refs, out_ref). Applies expression_fn elementwise."""
    in_refs, out_ref = refs[:-1], refs[-1]
    vals = [r[...] for r in in_refs]
    out_ref[...] = expression_fn(*vals).astype(out_ref.dtype)


def _round_up(x, m):
    return ((x + m - 1) // m) * m


def _build_pallas_runner(expression_fn, shape, in_dtypes, out_dtype):
    total = math.prod(shape)
    # Widest lane width that divides the flat size (reshape is a free bitcast).
    lanes = next(l for l in _LANE_CANDIDATES if total % l == 0)
    rows = total // lanes

    all_dtypes = list(in_dtypes) + [out_dtype]
    itemsizes = [jnp.dtype(d).itemsize for d in all_dtypes]
    # Sublane packing: f32 -> 8-row tiles, bf16 -> 16, int8/fp8 -> 32.
    row_mult = max(8, max(32 // it for it in itemsizes))

    # 2x for double-buffering every input and the output block.
    bytes_per_row_all_bufs = 2 * lanes * sum(itemsizes)
    budget_rows = max(row_mult,
                      (_VMEM_BUDGET_BYTES // bytes_per_row_all_bufs)
                      // row_mult * row_mult)
    # Keep >= 2 grid steps when possible so v7x can shard across its 2 TCs.
    block_rows = min(budget_rows, _round_up(pl.cdiv(rows, 2), row_mult))
    grid = (pl.cdiv(rows, block_rows),)

    kernel = functools.partial(_expression_kernel, expression_fn)
    block_spec = pl.BlockSpec((block_rows, lanes), lambda i: (i, 0))

    call = pl.pallas_call(
        kernel,
        out_shape=jax.ShapeDtypeStruct((rows, lanes), out_dtype),
        grid=grid,
        in_specs=[block_spec] * len(in_dtypes),
        out_specs=block_spec,
        compiler_params=pltpu.CompilerParams(
            dimension_semantics=("parallel",),
            vmem_limit_bytes=32 * 1024 * 1024,
        ),
    )

    @jax.jit
    def run(*xs):
        tiled = [xi.reshape(rows, lanes) for xi in xs]
        return call(*tiled).reshape(shape)

    return run


class Expression:
    """Pallas equivalent of torch Expression: applies expression_fn on forward.

    expression_fn must be jnp-traceable. Purely elementwise expressions over
    same-shaped inputs are executed in a Pallas TPU kernel; everything else
    (including tiny inputs) is applied directly, matching PyTorch semantics.
    """

    def __init__(self, expression_fn):
        self.expression_fn = expression_fn
        self._cache = {}  # (shapes, dtypes) -> pallas runner or None

    def __call__(self, *x):
        return self.forward(*x)

    def forward(self, *x):
        assert len(x) >= 1
        x = tuple(jnp.asarray(xi) for xi in x)
        key = tuple((xi.shape, str(jnp.dtype(xi.dtype))) for xi in x)
        if key not in self._cache:
            self._cache[key] = self._plan(x)
        runner = self._cache[key]
        if runner is None:
            # Tiny / non-elementwise / lane-misaligned: plain application
            # (XLA fuses this fine; avoids any padding copies).
            return self.expression_fn(*x)
        return runner(*x)

    def _plan(self, x):
        shape = x[0].shape
        try:
            out_aval = jax.eval_shape(self.expression_fn, *x)
        except Exception:  # not abstractly traceable -> plain path
            return None
        elementwise = (
            isinstance(out_aval, jax.ShapeDtypeStruct)
            and all(xi.shape == shape for xi in x)
            and out_aval.shape == shape
        )
        total = math.prod(shape) if shape else 1
        if (not elementwise
                or total < _MIN_PALLAS_ELEMS
                or total % _LANE_CANDIDATES[-1] != 0):
            return None
        return _build_pallas_runner(
            self.expression_fn, shape, [xi.dtype for xi in x], out_aval.dtype)

    def __repr__(self):
        if hasattr(self.expression_fn, "func") and hasattr(self.expression_fn, "kwargs"):
            expression_str = "{:s} {:s}".format(
                self.expression_fn.func.__name__, str(self.expression_fn.kwargs))
        elif hasattr(self.expression_fn, "__name__"):
            expression_str = self.expression_fn.__name__
        else:
            expression_str = repr(self.expression_fn)
        return self.__class__.__name__ + "(expression=%s) " % expression_str


# --- example expressions (deterministic, no parameters) ---------------------
def square(x):
    return x * x


def safe_log(x, eps=1e-6):
    return jnp.log(jnp.clip(x, eps, None))


def square_then_safe_log(x):
    return safe_log(square(x))


def mul_add_one(a, b):
    return a * b + 1.0


if __name__ == "__main__":
    key = jax.random.PRNGKey(0)
    k1, k2, k3, k4 = jax.random.split(key, 4)

    # Small NCHW input like the braindecode use-case: fast plain path.
    x_small = jax.random.normal(k1, (2, 4, 16, 16), dtype=jnp.float32)
    expr1 = Expression(square_then_safe_log)
    out_small = jax.block_until_ready(expr1(x_small))
    ref_small = safe_log(square(x_small))
    assert out_small.shape == x_small.shape and out_small.dtype == x_small.dtype
    assert jnp.allclose(out_small, ref_small, atol=1e-5, rtol=1e-5)

    # Larger (but still small) NCHW input that exercises the Pallas kernel.
    x = jax.random.normal(k2, (2, 8, 64, 128), dtype=jnp.float32)
    y = jax.random.normal(k3, (2, 8, 64, 128), dtype=jnp.float32)

    # unary expression -> Pallas path
    out1 = jax.block_until_ready(expr1(x))
    ref1 = safe_log(square(x))
    assert out1.shape == x.shape and out1.dtype == x.dtype
    assert jnp.allclose(out1, ref1, atol=1e-5, rtol=1e-5)
    # second call reuses the cached pallas_call
    out1b = jax.block_until_ready(expr1(x))
    assert jnp.allclose(out1b, ref1, atol=1e-5, rtol=1e-5)

    # variadic expression (Expression.forward(*x)) -> Pallas path
    expr2 = Expression(mul_add_one)
    out2 = jax.block_until_ready(expr2(x, y))
    ref2 = x * y + 1.0
    assert out2.shape == x.shape and out2.dtype == ref2.dtype
    assert jnp.allclose(out2, ref2, atol=1e-5, rtol=1e-5)

    print("KERNEL_OK")
</pallas_src>

<mosaic_0001>
module attributes {stable_mosaic.version = 11 : i64} {
  func.func @_expression_kernel(%arg0: i32, %arg1: memref<64x1024xf32, #tpu.memory_space<vmem>>, %arg2: memref<64x1024xf32, #tpu.memory_space<vmem>>) attributes {dimension_semantics = [#tpu.dimension_semantics<parallel>], iteration_bounds = array<i64: 2>, scalar_prefetch = 0 : i64, scratch_operands = 0 : i64, tpu.core_type = #tpu.core_type<tc>, window_params = [{transform_indices = @transform_0, window_bounds = array<i64: 64, 1024>}, {transform_indices = @transform_1, window_bounds = array<i64: 64, 1024>}]} {
    %c0 = arith.constant 0 : index
    %c0_0 = arith.constant 0 : index
    %0 = vector.load %arg1[%c0, %c0_0] : memref<64x1024xf32, #tpu.memory_space<vmem>>, vector<64x1024xf32>
    %1 = arith.mulf %0, %0 : vector<64x1024xf32>
    %cst = arith.constant 9.99999997E-7 : f32
    %2 = vector.broadcast %cst : f32 to vector<64x1024xf32>
    %3 = arith.maximumf %2, %1 : vector<64x1024xf32>
    %4 = math.log %3 : vector<64x1024xf32>
    %c0_1 = arith.constant 0 : index
    %c0_2 = arith.constant 0 : index
    %5 = vector.load %arg2[%c0_1, %c0_2] : memref<64x1024xf32, #tpu.memory_space<vmem>>, vector<64x1024xf32>
    tpu.vector_store %arg2[%c0_1, %c0_2], %4 {strides = array<i32>} : memref<64x1024xf32, #tpu.memory_space<vmem>>, vector<64x1024xf32>,
    return
  }
  func.func @transform_0(%arg0: i32) -> (i32, i32) {
    %c0_i32 = arith.constant 0 : i32
    %c0_i32_0 = arith.constant 0 : i32
    return %arg0, %c0_i32 : i32, i32
  }
  func.func @transform_1(%arg0: i32) -> (i32, i32) {
    %c0_i32 = arith.constant 0 : i32
    %c0_i32_0 = arith.constant 0 : i32
    return %arg0, %c0_i32 : i32, i32
  }
}

</mosaic_0001>

<llo_original>
// kernel: run.1
$region0: #{run.1}
  #allocation0 [shape = 'u32[]', space=smem, size = 0x4, offset = 0x4, fixed_abs, tag = 'smem constant byte address 0x4 - core index']
  #allocation1 [shape = 'u32[144,128]{1,0:T(1,128)}', space=vmem, size = 0x12000, scoped, tag = 'internal scratch']
  %s0 = inlined_call_operand.vmem [shape: f32[128,1024], index: 0, kind: input, shape index: {}]
  %s1 = inlined_call_operand.vmem [shape: f32[128,1024], index: 1, kind: output, shape index: {}]
  %s2 = sld [smem:[#allocation0]]
  $region37: #{run.1} parent=0
    _
  %s4 = ssub.s32 1, %s2
  %s5 = scalar_select 0, %s4, %s2
  loop: start=0, step=1, limit=4
  $region2: #{run.1} parent=0 // loop_pre_header
    _
  $region3: #{run.1} parent=0 // loop_header
    %s7 = sphi 0, %s11
    %p8 = scmp.ge.s32.totalorder %s7, 4
    %s17 = sphi 0, %s19
    %s20 = sphi 0, %s17
    %s21 = sphi 0, %s20
    %s37 = sphi 0, %s21
    %s43 = sphi 0, %s45
    %s46 = sphi 0, %s43
    %s47 = sphi 0, %s46
    %s63 = sphi 0, %s47
  $region4: #{run.1} parent=0 // loop_header_branch
    %10 = sbr.rel (%p8) target = $region8
  $region5: #{run.1} parent=0 // loop_body
    %s12 = ssub.s32 %s7, 1
    %s13 = ssub.s32 %s7, 2
    %s14 = sadd.s32 %s7, 1
    %s15 = ssub.s32 %s7, %s14
    %p16 = scmp.eq.s32.totalorder %s15, 0
    %s18 = sadd.s32 %s17, 1
    %s19 = scalar_select %p16, %s17, %s18
    %p22 = pneg %p16
    %p23 = scmp.eq.s32.totalorder %s7, 1
    %p24 = por %p22, %p23
    %p25 = scmp.ne.s32.totalorder %s17, %s20
    %p26 = scmp.eq.s32.totalorder %s7, 0
    %p27 = por %p25, %p26
    %p28 = scmp.ne.s32.totalorder %s17, %s20
    %p29 = scmp.eq.s32.totalorder %s12, 1
    %p30 = por %p28, %p29
    %p31 = scmp.ne.s32.totalorder %s20, %s21
    %p32 = scmp.eq.s32.totalorder %s12, 0
    %p33 = por %p31, %p32
    %p34 = scmp.ne.s32.totalorder %s20, %s21
    %p35 = scmp.eq.s32.totalorder %s13, 1
    %p36 = por %p34, %p35
    %p38 = scmp.ne.s32.totalorder %s21, %s37
    %p39 = scmp.eq.s32.totalorder %s13, 0
    %p40 = por %p38, %p39
    %s41 = ssub.s32 %s7, %s14
    %p42 = scmp.eq.s32.totalorder %s41, 0
    %s44 = sadd.s32 %s43, 1
    %s45 = scalar_select %p42, %s43, %s44
    %p48 = pneg %p42
    %p49 = scmp.eq.s32.totalorder %s7, 1
    %p50 = por %p48, %p49
    %p51 = scmp.ne.s32.totalorder %s43, %s46
    %p52 = scmp.eq.s32.totalorder %s7, 0
    %p53 = por %p51, %p52
    %p54 = scmp.ne.s32.totalorder %s43, %s46
    %p55 = scmp.eq.s32.totalorder %s12, 1
    %p56 = por %p54, %p55
    %p57 = scmp.ne.s32.totalorder %s46, %s47
    %p58 = scmp.eq.s32.totalorder %s12, 0
    %p59 = por %p57, %p58
    %p60 = scmp.ne.s32.totalorder %s46, %s47
    %p61 = scmp.eq.s32.totalorder %s13, 1
    %p62 = por %p60, %p61
    %p64 = scmp.ne.s32.totalorder %s47, %s63
    %p65 = scmp.eq.s32.totalorder %s13, 0
    %p66 = por %p64, %p65
    %p67 = scmp.le.s32.totalorder 1, %s7
    %p68 = scmp.lt.s32.totalorder %s7, 3
    %p69 = pnand %p67, %p68
    %p70 = pneg %p69
    // Predicated region
    $region9: #{run.1} parent=5 // pred_check
      _
    $region10: #{run.1} parent=5 // pred_check_branch
      %72 = sbr.rel (%p69) target = $region12
    $region11: #{run.1} parent=5 // pred_region
      %s73 = ssub.s32 %s7, 1
    $region12: #{run.1} parent=5 // pred_fallthru
      _
    %p74 = scmp.lt.s32.totalorder %s7, 2
    // Predicated region
    $region13: #{run.1} parent=5 // pred_check
      %p75 = pneg %p74
    $region14: #{run.1} parent=5 // pred_check_branch
      %77 = sbr.rel (%p75) target = $region16
    $region15: #{run.1} parent=5 // pred_region
      // Predicated region
      $region17: #{run.1} parent=15 // pred_check
        %p78 = pneg %p27
      $region18: #{run.1} parent=15 // pred_check_branch
        %80 = sbr.rel (%p78) target = $region20
      $region19: #{run.1} parent=15 // pred_region
        %s81 = smul.u32 8, %s7
        %p82 = scmp.lt.s32.totalorder %s81, 15
        %s83 = scalar_select %p82, %s81, 15
        %s84 = smul.addr %s83, 8
        %s85 = smul.addr %s84, 8
        %s86 = scalar_lea.vmem %s0, %s85
        %s87 = smul.u32 8, %s7
      $region20: #{run.1} parent=15 // pred_fallthru
        _
    $region16: #{run.1} parent=5 // pred_fallthru
      _
    %p88 = scmp.le.s32.totalorder 1, %s7
    %p89 = scmp.lt.s32.totalorder %s7, 3
    %p90 = pnand %p88, %p89
    %p91 = pneg %p90
    // Predicated region
    $region21: #{run.1} parent=5 // pred_check
      _
    $region22: #{run.1} parent=5 // pred_check_branch
      %93 = sbr.rel (%p90) target = $region24
    $region23: #{run.1} parent=5 // pred_region
      %s94 = ssub.s32 %s7, 1
      %s95 = smul.u32 8, %s12
      %p96 = scmp.lt.s32.totalorder %s95, 15
      %s97 = scalar_select %p96, %s95, 15
      %s98 = smul.addr %s97, 8
      %s99 = smul.addr %s98, 8
      %s100 = scalar_lea.vmem %s0, %s99
      %p101 = pneg %p33
      %p102 = pneg %p30
      %p103 = pneg %p59
      %p104 = pneg %p56
      %s105 = smul.u32 8, %s12
      %p106 = scmp.lt.s32.totalorder %s105, 15
      %s107 = scalar_select %p106, %s105, 15
      %s108 = smul.addr %s107, 8
      %s109 = smul.addr %s108, 8
      %s110 = scalar_lea.vmem %s1, %s109
      %s111 = smul.u32 8, %s12
      %p112 = scmp.lt.s32.totalorder %s111, 15
      %s113 = scalar_select %p112, %s111, 15
      %s114 = smul.addr %s113, 8
      %s115 = smul.addr %s114, 8
      %s116 = scalar_lea.vmem %s0, %s115
      %s117 = smul.u32 8, %s12
      %s118 = smul.u32 8, %s12
      %p119 = scmp.lt.s32.totalorder %s118, 15
      %s120 = scalar_select %p119, %s118, 15
      %s121 = smul.addr %s120, 8
      %s122 = smul.addr %s121, 8
      %s123 = scalar_lea.vmem %s1, %s122
      %s124 = smul.u32 8, %s12
      %v125 = vld [vmem:[%s116] sm:$0xff]
      %v126 = vld [vmem:[%s116 + $0x8] sm:$0xff]
      %v127 = vld [vmem:[%s116 + $0x10] sm:$0xff]
      %v128 = vld [vmem:[%s116 + $0x18] sm:$0xff]
      %v129 = vld [vmem:[%s116 + $0x20] sm:$0xff]
      %v130 = vld [vmem:[%s116 + $0x28] sm:$0xff]
      %v131 = vld [vmem:[%s116 + $0x30] sm:$0xff]
      %v132 = vld [vmem:[%s116 + $0x38] sm:$0xff]
      %v133 = vld [vmem:[%s116 + $0x40] sm:$0xff]
      %v134 = vld [vmem:[%s116 + $0x48] sm:$0xff]
      %v135 = vld [vmem:[%s116 + $0x50] sm:$0xff]
      %v136 = vld [vmem:[%s116 + $0x58] sm:$0xff]
      %v137 = vld [vmem:[%s116 + $0x60] sm:$0xff]
      %v138 = vld [vmem:[%s116 + $0x68] sm:$0xff]
      %v139 = vld [vmem:[%s116 + $0x70] sm:$0xff]
      %v140 = vld [vmem:[%s116 + $0x78] sm:$0xff]
      %v141 = vld [vmem:[%s116 + $0x80] sm:$0xff]
      %v142 = vld [vmem:[%s116 + $0x88] sm:$0xff]
      %v143 = vld [vmem:[%s116 + $0x90] sm:$0xff]
      %v144 = vld [vmem:[%s116 + $0x98] sm:$0xff]
      %v145 = vld [vmem:[%s116 + $0xa0] sm:$0xff]
      %v146 = vld [vmem:[%s116 + $0xa8] sm:$0xff]
      %v147 = vld [vmem:[%s116 + $0xb0] sm:$0xff]
      %v148 = vld [vmem:[%s116 + $0xb8] sm:$0xff]
      %v149 = vld [vmem:[%s116 + $0xc0] sm:$0xff]
      %v150 = vld [vmem:[%s116 + $0xc8] sm:$0xff]
      %v151 = vld [vmem:[%s116 + $0xd0] sm:$0xff]
      %v152 = vld [vmem:[%s116 + $0xd8] sm:$0xff]
      %v153 = vld [vmem:[%s116 + $0xe0] sm:$0xff]
      %v154 = vld [vmem:[%s116 + $0xe8] sm:$0xff]
      %v155 = vld [vmem:[%s116 + $0xf0] sm:$0xff]
      %v156 = vld [vmem:[%s116 + $0xf8] sm:$0xff]
      %v157 = vld [vmem:[%s116 + $0x100] sm:$0xff]
      %v158 = vld [vmem:[%s116 + $0x108] sm:$0xff]
      %v159 = vld [vmem:[%s116 + $0x110] sm:$0xff]
      %v160 = vld [vmem:[%s116 + $0x118] sm:$0xff]
      %v161 = vld [vmem:[%s116 + $0x120] sm:$0xff]
      %v162 = vld [vmem:[%s116 + $0x128] sm:$0xff]
      %v163 = vld [vmem:[%s116 + $0x130] sm:$0xff]
      %v164 = vld [vmem:[%s116 + $0x138] sm:$0xff]
      %v165 = vld [vmem:[%s116 + $0x140] sm:$0xff]
      %v166 = vld [vmem:[%s116 + $0x148] sm:$0xff]
      %v167 = vld [vmem:[%s116 + $0x150] sm:$0xff]
      %v168 = vld [vmem:[%s116 + $0x158] sm:$0xff]
      %v169 = vld [vmem:[%s116 + $0x160] sm:$0xff]
      %v170 = vld [vmem:[%s116 + $0x168] sm:$0xff]
      %v171 = vld [vmem:[%s116 + $0x170] sm:$0xff]
      %v172 = vld [vmem:[%s116 + $0x178] sm:$0xff]
      %v173 = vld [vmem:[%s116 + $0x180] sm:$0xff]
      %v174 = vld [vmem:[%s116 + $0x188] sm:$0xff]
      %v175 = vld [vmem:[%s116 + $0x190] sm:$0xff]
      %v176 = vld [vmem:[%s116 + $0x198] sm:$0xff]
      %v177 = vld [vmem:[%s116 + $0x1a0] sm:$0xff]
      %v178 = vld [vmem:[%s116 + $0x1a8] sm:$0xff]
      %v179 = vld [vmem:[%s116 + $0x1b0] sm:$0xff]
      %v180 = vld [vmem:[%s116 + $0x1b8] sm:$0xff]
      %v181 = vld [vmem:[%s116 + $0x1c0] sm:$0xff]
      %v182 = vld [vmem:[%s116 + $0x1c8] sm:$0xff]
      %v183 = vld [vmem:[%s116 + $0x1d0] sm:$0xff]
      %v184 = vld [vmem:[%s116 + $0x1d8] sm:$0xff]
      %v185 = vld [vmem:[%s116 + $0x1e0] sm:$0xff]
      %v186 = vld [vmem:[%s116 + $0x1e8] sm:$0xff]
      %v187 = vld [vmem:[%s116 + $0x1f0] sm:$0xff]
      %v188 = vld [vmem:[%s116 + $0x1f8] sm:$0xff]
      %v189 = vmul.f32 %v125, %v125
      %v190 = vmul.f32 %v126, %v126
      %v191 = vmul.f32 %v127, %v127
      %v192 = vmul.f32 %v128, %v128
      %v193 = vmul.f32 %v129, %v129
      %v194 = vmul.f32 %v130, %v130
      %v195 = vmul.f32 %v131, %v131
      %v196 = vmul.f32 %v132, %v132
      %v197 = vmul.f32 %v133, %v133
      %v198 = vmul.f32 %v134, %v134
      %v199 = vmul.f32 %v135, %v135
      %v200 = vmul.f32 %v136, %v136
      %v201 = vmul.f32 %v137, %v137
      %v202 = vmul.f32 %v138, %v138
      %v203 = vmul.f32 %v139, %v139
      %v204 = vmul.f32 %v140, %v140
      %v205 = vmul.f32 %v141, %v141
      %v206 = vmul.f32 %v142, %v142
      %v207 = vmul.f32 %v143, %v143
      %v208 = vmul.f32 %v144, %v144
      %v209 = vmul.f32 %v145, %v145
      %v210 = vmul.f32 %v146, %v146
      %v211 = vmul.f32 %v147, %v147
      %v212 = vmul.f32 %v148, %v148
      %v213 = vmul.f32 %v149, %v149
      %v214 = vmul.f32 %v150, %v150
      %v215 = vmul.f32 %v151, %v151
      %v216 = vmul.f32 %v152, %v152
      %v217 = vmul.f32 %v153, %v153
      %v218 = vmul.f32 %v154, %v154
      %v219 = vmul.f32 %v155, %v155
      %v220 = vmul.f32 %v156, %v156
      %v221 = vmul.f32 %v157, %v157
      %v222 = vmul.f32 %v158, %v158
      %v223 = vmul.f32 %v159, %v159
      %v224 = vmul.f32 %v160, %v160
      %v225 = vmul.f32 %v161, %v161
      %v226 = vmul.f32 %v162, %v162
      %v227 = vmul.f32 %v163, %v163
      %v228 = vmul.f32 %v164, %v164
      %v229 = vmul.f32 %v165, %v165
      %v230 = vmul.f32 %v166, %v166
      %v231 = vmul.f32 %v167, %v167
      %v232 = vmul.f32 %v168, %v168
      %v233 = vmul.f32 %v169, %v169
      %v234 = vmul.f32 %v170, %v170
      %v235 = vmul.f32 %v171, %v171
      %v236 = vmul.f32 %v172, %v172
      %v237 = vmul.f32 %v173, %v173
      %v238 = vmul.f32 %v174, %v174
      %v239 = vmul.f32 %v175, %v175
      %v240 = vmul.f32 %v176, %v176
      %v241 = vmul.f32 %v177, %v177
      %v242 = vmul.f32 %v178, %v178
      %v243 = vmul.f32 %v179, %v179
      %v244 = vmul.f32 %v180, %v180
      %v245 = vmul.f32 %v181, %v181
      %v246 = vmul.f32 %v182, %v182
      %v247 = vmul.f32 %v183, %v183
      %v248 = vmul.f32 %v184, %v184
      %v249 = vmul.f32 %v185, %v185
      %v250 = vmul.f32 %v186, %v186
      %v251 = vmul.f32 %v187, %v187
      %v252 = vmul.f32 %v188, %v188
      %v253 = vmax.f32 %v189, 1e-06
      %v254 = vmax.f32 %v190, 1e-06
      %v255 = vmax.f32 %v191, 1e-06
      %v256 = vmax.f32 %v192, 1e-06
      %v257 = vmax.f32 %v193, 1e-06
      %v258 = vmax.f32 %v194, 1e-06
      %v259 = vmax.f32 %v195, 1e-06
      %v260 = vmax.f32 %v196, 1e-06
      %v261 = vmax.f32 %v197, 1e-06
      %v262 = vmax.f32 %v198, 1e-06
      %v263 = vmax.f32 %v199, 1e-06
      %v264 = vmax.f32 %v200, 1e-06
      %v265 = vmax.f32 %v201, 1e-06
      %v266 = vmax.f32 %v202, 1e-06
      %v267 = vmax.f32 %v203, 1e-06
      %v268 = vmax.f32 %v204, 1e-06
      %v269 = vmax.f32 %v205, 1e-06
      %v270 = vmax.f32 %v206, 1e-06
      %v271 = vmax.f32 %v207, 1e-06
      %v272 = vmax.f32 %v208, 1e-06
      %v273 = vmax.f32 %v209, 1e-06
      %v274 = vmax.f32 %v210, 1e-06
      %v275 = vmax.f32 %v211, 1e-06
      %v276 = vmax.f32 %v212, 1e-06
      %v277 = vmax.f32 %v213, 1e-06
      %v278 = vmax.f32 %v214, 1e-06
      %v279 = vmax.f32 %v215, 1e-06
      %v280 = vmax.f32 %v216, 1e-06
      %v281 = vmax.f32 %v217, 1e-06
      %v282 = vmax.f32 %v218, 1e-06
      %v283 = vmax.f32 %v219, 1e-06
      %v284 = vmax.f32 %v220, 1e-06
      %v285 = vmax.f32 %v221, 1e-06
      %v286 = vmax.f32 %v222, 1e-06
      %v287 = vmax.f32 %v223, 1e-06
      %v288 = vmax.f32 %v224, 1e-06
      %v289 = vmax.f32 %v225, 1e-06
      %v290 = vmax.f32 %v226, 1e-06
      %v291 = vmax.f32 %v227, 1e-06
      %v292 = vmax.f32 %v228, 1e-06
      %v293 = vmax.f32 %v229, 1e-06
      %v294 = vmax.f32 %v230, 1e-06
      %v295 = vmax.f32 %v231, 1e-06
      %v296 = vmax.f32 %v232, 1e-06
      %v297 = vmax.f32 %v233, 1e-06
      %v298 = vmax.f32 %v234, 1e-06
      %v299 = vmax.f32 %v235, 1e-06
      %v300 = vmax.f32 %v236, 1e-06
      %v301 = vmax.f32 %v237, 1e-06
      %v302 = vmax.f32 %v238, 1e-06
      %v303 = vmax.f32 %v239, 1e-06
      %v304 = vmax.f32 %v240, 1e-06
      %v305 = vmax.f32 %v241, 1e-06
      %v306 = vmax.f32 %v242, 1e-06
      %v307 = vmax.f32 %v243, 1e-06
      %v308 = vmax.f32 %v244, 1e-06
      %v309 = vmax.f32 %v245, 1e-06
      %v310 = vmax.f32 %v246, 1e-06
      %v311 = vmax.f32 %v247, 1e-06
      %v312 = vmax.f32 %v248, 1e-06
      %v313 = vmax.f32 %v249, 1e-06
      %v314 = vmax.f32 %v250, 1e-06
      %v315 = vmax.f32 %v251, 1e-06
      %v316 = vmax.f32 %v252, 1e-06
      %v317 = vlog2.pop %v253
      %v318 = vmul.f32 %v317, 0.6931472
      %v319 = vlog2.pop %v254
      %v320 = vmul.f32 %v319, 0.6931472
      %v321 = vlog2.pop %v255
      %v322 = vmul.f32 %v321, 0.6931472
      %v323 = vlog2.pop %v256
      %v324 = vmul.f32 %v323, 0.6931472
      %v325 = vlog2.pop %v257
      %v326 = vmul.f32 %v325, 0.6931472
      %v327 = vlog2.pop %v258
      %v328 = vmul.f32 %v327, 0.6931472
      %v329 = vlog2.pop %v259
      %v330 = vmul.f32 %v329, 0.6931472
      %v331 = vlog2.pop %v260
      %v332 = vmul.f32 %v331, 0.6931472
      %v333 = vlog2.pop %v261
      %v334 = vmul.f32 %v333, 0.6931472
      %v335 = vlog2.pop %v262
      %v336 = vmul.f32 %v335, 0.6931472
      %v337 = vlog2.pop %v263
      %v338 = vmul.f32 %v337, 0.6931472
      %v339 = vlog2.pop %v264
      %v340 = vmul.f32 %v339, 0.6931472
      %v341 = vlog2.pop %v265
      %v342 = vmul.f32 %v341, 0.6931472
      %v343 = vlog2.pop %v266
      %v344 = vmul.f32 %v343, 0.6931472
      %v345 = vlog2.pop %v267
      %v346 = vmul.f32 %v345, 0.6931472
      %v347 = vlog2.pop %v268
      %v348 = vmul.f32 %v347, 0.6931472
      %v349 = vlog2.pop %v269
      %v350 = vmul.f32 %v349, 0.6931472
      %v351 = vlog2.pop %v270
      %v352 = vmul.f32 %v351, 0.6931472
      %v353 = vlog2.pop %v271
      %v354 = vmul.f32 %v353, 0.6931472
      %v355 = vlog2.pop %v272
      %v356 = vmul.f32 %v355, 0.6931472
      %v357 = vlog2.pop %v273
      %v358 = vmul.f32 %v357, 0.6931472
      %v359 = vlog2.pop %v274
      %v360 = vmul.f32 %v359, 0.6931472
      %v361 = vlog2.pop %v275
      %v362 = vmul.f32 %v361, 0.6931472
      %v363 = vlog2.pop %v276
      %v364 = vmul.f32 %v363, 0.6931472
      %v365 = vlog2.pop %v277
      %v366 = vmul.f32 %v365, 0.6931472
      %v367 = vlog2.pop %v278
      %v368 = vmul.f32 %v367, 0.6931472
      %v369 = vlog2.pop %v279
      %v370 = vmul.f32 %v369, 0.6931472
      %v371 = vlog2.pop %v280
      %v372 = vmul.f32 %v371, 0.6931472
      %v373 = vlog2.pop %v281
      %v374 = vmul.f32 %v373, 0.6931472
      %v375 = vlog2.pop %v282
      %v376 = vmul.f32 %v375, 0.6931472
      %v377 = vlog2.pop %v283
      %v378 = vmul.f32 %v377, 0.6931472
      %v379 = vlog2.pop %v284
      %v380 = vmul.f32 %v379, 0.6931472
      %v381 = vlog2.pop %v285
      %v382 = vmul.f32 %v381, 0.6931472
      %v383 = vlog2.pop %v286
      %v384 = vmul.f32 %v383, 0.6931472
      %v385 = vlog2.pop %v287
      %v386 = vmul.f32 %v385, 0.6931472
      %v387 = vlog2.pop %v288
      %v388 = vmul.f32 %v387, 0.6931472
      %v389 = vlog2.pop %v289
      %v390 = vmul.f32 %v389, 0.6931472
      %v391 = vlog2.pop %v290
      %v392 = vmul.f32 %v391, 0.6931472
      %v393 = vlog2.pop %v291
      %v394 = vmul.f32 %v393, 0.6931472
      %v395 = vlog2.pop %v292
      %v396 = vmul.f32 %v395, 0.6931472
      %v397 = vlog2.pop %v293
      %v398 = vmul.f32 %v397, 0.6931472
      %v399 = vlog2.pop %v294
      %v400 = vmul.f32 %v399, 0.6931472
      %v401 = vlog2.pop %v295
      %v402 = vmul.f32 %v401, 0.6931472
      %v403 = vlog2.pop %v296
      %v404 = vmul.f32 %v403, 0.6931472
      %v405 = vlog2.pop %v297
      %v406 = vmul.f32 %v405, 0.6931472
      %v407 = vlog2.pop %v298
      %v408 = vmul.f32 %v407, 0.6931472
      %v409 = vlog2.pop %v299
      %v410 = vmul.f32 %v409, 0.6931472
      %v411 = vlog2.pop %v300
      %v412 = vmul.f32 %v411, 0.6931472
      %v413 = vlog2.pop %v301
      %v414 = vmul.f32 %v413, 0.6931472
      %v415 = vlog2.pop %v302
      %v416 = vmul.f32 %v415, 0.6931472
      %v417 = vlog2.pop %v303
      %v418 = vmul.f32 %v417, 0.6931472
      %v419 = vlog2.pop %v304
      %v420 = vmul.f32 %v419, 0.6931472
      %v421 = vlog2.pop %v305
      %v422 = vmul.f32 %v421, 0.6931472
      %v423 = vlog2.pop %v306
      %v424 = vmul.f32 %v423, 0.6931472
      %v425 = vlog2.pop %v307
      %v426 = vmul.f32 %v425, 0.6931472
      %v427 = vlog2.pop %v308
      %v428 = vmul.f32 %v427, 0.6931472
      %v429 = vlog2.pop %v309
      %v430 = vmul.f32 %v429, 0.6931472
      %v431 = vlog2.pop %v310
      %v432 = vmul.f32 %v431, 0.6931472
      %v433 = vlog2.pop %v311
      %v434 = vmul.f32 %v433, 0.6931472
      %v435 = vlog2.pop %v312
      %v436 = vmul.f32 %v435, 0.6931472
      %v437 = vlog2.pop %v313
      %v438 = vmul.f32 %v437, 0.6931472
      %v439 = vlog2.pop %v314
      %v440 = vmul.f32 %v439, 0.6931472
      %v441 = vlog2.pop %v315
      %v442 = vmul.f32 %v441, 0.6931472
      %v443 = vlog2.pop %v316
      %v444 = vmul.f32 %v443, 0.6931472
      %445 = vst [vmem:[%s123] sm:$0xff] %v318
      %446 = vst [vmem:[%s123 + $0x8] sm:$0xff] %v320
      %447 = vst [vmem:[%s123 + $0x10] sm:$0xff] %v322
      %448 = vst [vmem:[%s123 + $0x18] sm:$0xff] %v324
      %449 = vst [vmem:[%s123 + $0x20] sm:$0xff] %v326
      %450 = vst [vmem:[%s123 + $0x28] sm:$0xff] %v328
      %451 = vst [vmem:[%s123 + $0x30] sm:$0xff] %v330
      %452 = vst [vmem:[%s123 + $0x38] sm:$0xff] %v332
      %453 = vst [vmem:[%s123 + $0x40] sm:$0xff] %v334
      %454 = vst [vmem:[%s123 + $0x48] sm:$0xff] %v336
      %455 = vst [vmem:[%s123 + $0x50] sm:$0xff] %v338
      %456 = vst [vmem:[%s123 + $0x58] sm:$0xff] %v340
      %457 = vst [vmem:[%s123 + $0x60] sm:$0xff] %v342
      %458 = vst [vmem:[%s123 + $0x68] sm:$0xff] %v344
      %459 = vst [vmem:[%s123 + $0x70] sm:$0xff] %v346
      %460 = vst [vmem:[%s123 + $0x78] sm:$0xff] %v348
      %461 = vst [vmem:[%s123 + $0x80] sm:$0xff] %v350
      %462 = vst [vmem:[%s123 + $0x88] sm:$0xff] %v352
      %463 = vst [vmem:[%s123 + $0x90] sm:$0xff] %v354
      %464 = vst [vmem:[%s123 + $0x98] sm:$0xff] %v356
      %465 = vst [vmem:[%s123 + $0xa0] sm:$0xff] %v358
      %466 = vst [vmem:[%s123 + $0xa8] sm:$0xff] %v360
      %467 = vst [vmem:[%s123 + $0xb0] sm:$0xff] %v362
      %468 = vst [vmem:[%s123 + $0xb8] sm:$0xff] %v364
      %469 = vst [vmem:[%s123 + $0xc0] sm:$0xff] %v366
      %470 = vst [vmem:[%s123 + $0xc8] sm:$0xff] %v368
      %471 = vst [vmem:[%s123 + $0xd0] sm:$0xff] %v370
      %472 = vst [vmem:[%s123 + $0xd8] sm:$0xff] %v372
      %473 = vst [vmem:[%s123 + $0xe0] sm:$0xff] %v374
      %474 = vst [vmem:[%s123 + $0xe8] sm:$0xff] %v376
      %475 = vst [vmem:[%s123 + $0xf0] sm:$0xff] %v378
      %476 = vst [vmem:[%s123 + $0xf8] sm:$0xff] %v380
      %477 = vst [vmem:[%s123 + $0x100] sm:$0xff] %v382
      %478 = vst [vmem:[%s123 + $0x108] sm:$0xff] %v384
      %479 = vst [vmem:[%s123 + $0x110] sm:$0xff] %v386
      %480 = vst [vmem:[%s123 + $0x118] sm:$0xff] %v388
      %481 = vst [vmem:[%s123 + $0x120] sm:$0xff] %v390
      %482 = vst [vmem:[%s123 + $0x128] sm:$0xff] %v392
      %483 = vst [vmem:[%s123 + $0x130] sm:$0xff] %v394
      %484 = vst [vmem:[%s123 + $0x138] sm:$0xff] %v396
      %485 = vst [vmem:[%s123 + $0x140] sm:$0xff] %v398
      %486 = vst [vmem:[%s123 + $0x148] sm:$0xff] %v400
      %487 = vst [vmem:[%s123 + $0x150] sm:$0xff] %v402
      %488 = vst [vmem:[%s123 + $0x158] sm:$0xff] %v404
      %489 = vst [vmem:[%s123 + $0x160] sm:$0xff] %v406
      %490 = vst [vmem:[%s123 + $0x168] sm:$0xff] %v408
      %491 = vst [vmem:[%s123 + $0x170] sm:$0xff] %v410
      %492 = vst [vmem:[%s123 + $0x178] sm:$0xff] %v412
      %493 = vst [vmem:[%s123 + $0x180] sm:$0xff] %v414
      %494 = vst [vmem:[%s123 + $0x188] sm:$0xff] %v416
      %495 = vst [vmem:[%s123 + $0x190] sm:$0xff] %v418
      %496 = vst [vmem:[%s123 + $0x198] sm:$0xff] %v420
      %497 = vst [vmem:[%s123 + $0x1a0] sm:$0xff] %v422
      %498 = vst [vmem:[%s123 + $0x1a8] sm:$0xff] %v424
      %499 = vst [vmem:[%s123 + $0x1b0] sm:$0xff] %v426
      %500 = vst [vmem:[%s123 + $0x1b8] sm:$0xff] %v428
      %501 = vst [vmem:[%s123 + $0x1c0] sm:$0xff] %v430
      %502 = vst [vmem:[%s123 + $0x1c8] sm:$0xff] %v432
      %503 = vst [vmem:[%s123 + $0x1d0] sm:$0xff] %v434
      %504 = vst [vmem:[%s123 + $0x1d8] sm:$0xff] %v436
      %505 = vst [vmem:[%s123 + $0x1e0] sm:$0xff] %v438
      %506 = vst [vmem:[%s123 + $0x1e8] sm:$0xff] %v440
      %507 = vst [vmem:[%s123 + $0x1f0] sm:$0xff] %v442
      %508 = vst [vmem:[%s123 + $0x1f8] sm:$0xff] %v444
      %s509 = smul.u32 8, %s12
      %p510 = scmp.lt.s32.totalorder %s509, 15
      %s511 = scalar_select %p510, %s509, 15
      %s512 = smul.addr %s511, 8
      %s513 = smul.addr %s512, 8
      %s514 = scalar_lea.vmem %s1, %s513
      // Predicated region
      $region25: #{run.1} parent=23 // pred_check
        %p515 = pneg %p56
      $region26: #{run.1} parent=23 // pred_check_branch
        %517 = sbr.rel (%p515) target = $region28
      $region27: #{run.1} parent=23 // pred_region
        %s518 = smul.u32 8, %s12
      $region28: #{run.1} parent=23 // pred_fallthru
        _
    $region24: #{run.1} parent=5 // pred_fallthru
      _
    %p519 = scmp.le.s32.totalorder 2, %s7
    // Predicated region
    $region29: #{run.1} parent=5 // pred_check
      %p520 = pneg %p519
    $region30: #{run.1} parent=5 // pred_check_branch
      %522 = sbr.rel (%p520) target = $region32
    $region31: #{run.1} parent=5 // pred_region
      %s523 = ssub.s32 %s7, 2
      // Predicated region
      $region33: #{run.1} parent=31 // pred_check
        %p524 = pneg %p62
      $region34: #{run.1} parent=31 // pred_check_branch
        %526 = sbr.rel (%p524) target = $region36
      $region35: #{run.1} parent=31 // pred_region
        %s527 = smul.u32 8, %s13
        %p528 = scmp.lt.s32.totalorder %s527, 15
        %s529 = scalar_select %p528, %s527, 15
        %s530 = smul.addr %s529, 8
        %s531 = smul.addr %s530, 8
        %s532 = scalar_lea.vmem %s1, %s531
      $region36: #{run.1} parent=31 // pred_fallthru
        _
    $region32: #{run.1} parent=5 // pred_fallthru
      _
  $region6: #{run.1} parent=0 // loop_footer
    %s11 = sadd.s32 1, %s7
  $region7: #{run.1} parent=0 // loop_footer_branch
    %6 = sbr.rel target = $region3
  $region8: #{run.1} parent=0 // loop_exit
    _

</llo_original>
